<compile_context>
chip_gen: v7x
topology: tpu7x:2x2x1
jax: 0.10.0
libtpu: 0.0.40
codegen_flags: <defaults>
</compile_context>

<pallas_src>
import jax
import jax.numpy as jnp
from jax.experimental import pallas as pl
from jax.experimental.pallas import tpu as pltpu


def linear_kernel(x_t_ref, w_ref, b_ref, o_ref):
    # x_t_ref: (K, TB)  -- K on sublanes, batch on lanes (lane-dense load)
    # w_ref:   (K, 1)   -- broadcast across lanes on the VPU
    # b_ref:   (1, 1)   -- SMEM scalar
    # o_ref:   (1, TB)  -- lane-dense output store
    x = x_t_ref[...].astype(jnp.float32)
    w = w_ref[...].astype(jnp.float32)
    prod = x * w                                        # VPU, f32
    acc = jnp.sum(prod, axis=0, keepdims=True)          # sublane reduce (XLU), f32
    o_ref[...] = (acc + b_ref[0, 0]).astype(o_ref.dtype)


def simple_model_forward(x, weight, bias, *, max_tb=1024):
    """Forward of nn.Linear(10, 1): y = x @ W^T + b.

    x:      (B, 10) f32
    weight: (1, 10) f32  (PyTorch layout)
    bias:   (1,)    f32
    returns (B, 1)  f32
    """
    B, K = x.shape
    N, K2 = weight.shape
    assert K == K2 and N == 1

    # Lane-dense batch tiling: single full block for small B, else 128-aligned tiles.
    if B <= max_tb:
        tb = B
        B_pad = B
    else:
        tb = max_tb
        B_pad = ((B + tb - 1) // tb) * tb
        if B_pad != B:
            x = jnp.pad(x, ((0, B_pad - B), (0, 0)))

    # Layout plumbing (wrapper side): put batch on the lane axis.
    x_t = x.T                          # (K, B_pad) -- long contiguous lane rows
    w_col = weight.T                   # (K, 1)
    b2d = bias.reshape(1, 1)           # SMEM scalar

    grid = (B_pad // tb,)

    out_t = pl.pallas_call(
        linear_kernel,
        out_shape=jax.ShapeDtypeStruct((1, B_pad), x.dtype),
        grid=grid,
        in_specs=[
            pl.BlockSpec((K, tb), lambda i: (0, i)),                # x_T tile
            pl.BlockSpec((K, 1), lambda i: (0, 0)),                 # weight column (resident)
            pl.BlockSpec(memory_space=pltpu.MemorySpace.SMEM),      # bias scalar
        ],
        out_specs=pl.BlockSpec((1, tb), lambda i: (0, i)),
        compiler_params=pltpu.CompilerParams(
            # v7x: both TensorCores split the batch axis; harmless on v5e/v6e.
            dimension_semantics=("parallel",),
        ),
    )(x_t, w_col, b2d)

    # (1, B_pad) row-major == (B_pad, 1) data order: a free reshape, then slice.
    return out_t.reshape(B_pad, 1)[:B]


if __name__ == "__main__":
    key = jax.random.PRNGKey(0)
    k_x, k_w, k_b = jax.random.split(key, 3)

    B, IN, OUT = 8, 10, 1

    # Deterministic parameter init (PyTorch-style uniform(-1/sqrt(in), 1/sqrt(in))).
    bound = 1.0 / jnp.sqrt(jnp.float32(IN))
    weight = jax.random.uniform(k_w, (OUT, IN), jnp.float32, -bound, bound)  # (1, 10)
    bias = jax.random.uniform(k_b, (OUT,), jnp.float32, -bound, bound)       # (1,)

    x = jax.random.normal(k_x, (B, IN), jnp.float32)

    y = simple_model_forward(x, weight, bias)
    y = jax.block_until_ready(y)

    # Reference check against plain JAX (same math as PyTorch's nn.Linear).
    y_ref = x @ weight.T + bias
    assert y.shape == (B, OUT)
    assert jnp.allclose(y, y_ref, atol=1e-5, rtol=1e-5)

    print("KERNEL_OK")
</pallas_src>

<mosaic_0001>
module attributes {stable_mosaic.version = 11 : i64} {
  func.func @linear_kernel(%arg0: i32, %arg1: memref<10x8xf32, #tpu.memory_space<vmem>>, %arg2: memref<10x1xf32, #tpu.memory_space<vmem>>, %arg3: memref<1x1xf32, #tpu.memory_space<smem>>, %arg4: memref<1x8xf32, #tpu.memory_space<vmem>>) attributes {dimension_semantics = [#tpu.dimension_semantics<parallel>], iteration_bounds = array<i64: 1>, scalar_prefetch = 0 : i64, scratch_operands = 0 : i64, tpu.core_type = #tpu.core_type<tc>, window_params = [{transform_indices = @transform_0, window_bounds = array<i64: 10, 8>}, {pipeline_mode = #tpu.pipeline_mode<synchronous>, transform_indices = @transform_1, window_bounds = array<i64: 10, 1>}, {transform_indices = @transform_2, window_bounds = array<i64: 1, 1>}, {transform_indices = @transform_3, window_bounds = array<i64: 1, 8>}]} {
    %c0 = arith.constant 0 : index
    %c0_0 = arith.constant 0 : index
    %0 = vector.load %arg1[%c0, %c0_0] : memref<10x8xf32, #tpu.memory_space<vmem>>, vector<10x8xf32>
    %c0_1 = arith.constant 0 : index
    %c0_2 = arith.constant 0 : index
    %1 = vector.load %arg2[%c0_1, %c0_2] : memref<10x1xf32, #tpu.memory_space<vmem>>, vector<10x1xf32>
    %2 = vector.broadcast %1 : vector<10x1xf32> to vector<10x8xf32>
    %3 = arith.mulf %0, %2 : vector<10x8xf32>
    %cst = arith.constant dense<0.000000e+00> : vector<8xf32>
    %4 = vector.multi_reduction <add>, %3, %cst [0] : vector<10x8xf32> to vector<8xf32>
    %5 = vector.shape_cast %4 : vector<8xf32> to vector<1x8xf32>
    %c0_3 = arith.constant 0 : index
    %c0_4 = arith.constant 0 : index
    %6 = memref.load %arg3[%c0_3, %c0_4] : memref<1x1xf32, #tpu.memory_space<smem>>
    %7 = vector.broadcast %6 : f32 to vector<1x8xf32>
    %8 = arith.addf %5, %7 : vector<1x8xf32>
    %c0_5 = arith.constant 0 : index
    %c0_6 = arith.constant 0 : index
    %9 = vector.load %arg4[%c0_5, %c0_6] : memref<1x8xf32, #tpu.memory_space<vmem>>, vector<1x8xf32>
    tpu.vector_store %arg4[%c0_5, %c0_6], %8 {strides = array<i32>} : memref<1x8xf32, #tpu.memory_space<vmem>>, vector<1x8xf32>,
    return
  }
  func.func @transform_0(%arg0: i32) -> (i32, i32) {
    %c0_i32 = arith.constant 0 : i32
    %c0_i32_0 = arith.constant 0 : i32
    return %c0_i32, %arg0 : i32, i32
  }
  func.func @transform_1(%arg0: i32) -> (i32, i32) {
    %c0_i32 = arith.constant 0 : i32
    %c0_i32_0 = arith.constant 0 : i32
    %c0_i32_1 = arith.constant 0 : i32
    return %c0_i32, %c0_i32_0 : i32, i32
  }
  func.func @transform_2(%arg0: i32) -> (i32, i32) {
    %c0_i32 = arith.constant 0 : i32
    %c0_i32_0 = arith.constant 0 : i32
    %c0_i32_1 = arith.constant 0 : i32
    return %c0_i32, %c0_i32_0 : i32, i32
  }
  func.func @transform_3(%arg0: i32) -> (i32, i32) {
    %c0_i32 = arith.constant 0 : i32
    %c0_i32_0 = arith.constant 0 : i32
    return %c0_i32, %arg0 : i32, i32
  }
}

</mosaic_0001>

<llo_original>
// kernel: tpu_custom_call.1
$region0: #{tpu_custom_call.1}
  #allocation0 [shape = 'u32[]', space=smem, size = 0x4, offset = 0x4, fixed_abs, tag = 'smem constant byte address 0x4 - core index']
  #allocation1 [shape = 'u32[144,128]{1,0:T(1,128)}', space=vmem, size = 0x12000, scoped, tag = 'internal scratch']
  #allocation2 [shape = 'f32[1,1]{1,0:T(1,128)S(6)}', space=smem, size = 0x200, scoped, tag = 'scoped memory for tpu_custom_call.1']
  %s0 = inlined_call_operand.vmem [shape: f32[10,8], index: 0, kind: input, shape index: {}]
  %s1 = inlined_call_operand.vmem [shape: f32[10,1], index: 1, kind: input, shape index: {}]
  %s2 = inlined_call_operand.<no memory space> [shape: f32[1,1], index: 2, kind: input, shape index: {}]
  %s3 = inlined_call_operand.hbm [shape: f32[1,8], index: 3, kind: output, shape index: {}]
  %s4 = sld [smem:[#allocation0]]
  $region22: #{tpu_custom_call.1} parent=0
    _
  %s6 = ssub.s32 1, %s4
  %s7 = scalar_select 0, %s6, %s4
  %8 = sst [smem:[#allocation2]] %s2
  $region1: #{tpu_custom_call.1} parent=0
    #allocation3 [shape = 'u8[512]{0}', space=vmem, size = 0x400, scoped, tag = 'output window, operand 0, single buffered']
    #allocation4 [shape = 's32[1]{0}', space=sflag, size = 0x4, scoped, tag = 'scoped memory for tpu_custom_call.1']
    %9 = vsyncpa [#allocation4], 0
    // Predicated region
    $region2: #{tpu_custom_call.1} parent=1 // pred_check
      _
    $region3: #{tpu_custom_call.1} parent=1 // pred_check_branch
      %11 = sbr.rel (0) target = $region5
    $region4: #{tpu_custom_call.1} parent=1 // pred_region
      _
    $region5: #{tpu_custom_call.1} parent=1 // pred_fallthru
      _
    // Predicated region
    $region6: #{tpu_custom_call.1} parent=1 // pred_check
      _
    $region7: #{tpu_custom_call.1} parent=1 // pred_check_branch
      %13 = sbr.rel (0) target = $region9
    $region8: #{tpu_custom_call.1} parent=1 // pred_region
      _
    $region9: #{tpu_custom_call.1} parent=1 // pred_fallthru
      _
    // Predicated region
    $region10: #{tpu_custom_call.1} parent=1 // pred_check
      _
    $region11: #{tpu_custom_call.1} parent=1 // pred_check_branch
      %15 = sbr.rel (0) target = $region13
    $region12: #{tpu_custom_call.1} parent=1 // pred_region
      _
    $region13: #{tpu_custom_call.1} parent=1 // pred_fallthru
      _
    %v16 = vld [vmem:[%s0] sm:$0xff]
    %v17 = vld [vmem:[%s0 + $0x8] sm:$0x3]
    %v18 = vld [vmem:[%s1] sm:$0xff]
    %v19 = vld [vmem:[%s1 + $0x8] sm:$0x3]
    %21 = vset.pattern.permute.xlu0 0
    %22 = vperm.xlu0 %21, %v18
    %v23 = vpop.permute.xlu0 %22
    %26 = vset.pattern.permute.xlu0 0
    %27 = vperm.xlu0 %26, %v19
    %v28 = vpop.permute.xlu0 %27
    %v30 = vmul.f32 %v16, %v23
    %v31 = vmul.f32 %v17, %v28
    %vm32 = vcmask 64512
    %v33 = vsel %vm32, %v30, 0.0
    %vm34 = vcmask 58368
    %v35 = vsel %vm34, %v31, 0.0
    %v36 = vadd.f32 %v33, %v35
    %v37 = vrot.slane %v36, 4
    %v38 = vadd.f32 %v36, %v37
    %v39 = vrot.slane %v38, 2
    %v40 = vadd.f32 %v38, %v39
    %v41 = vrot.slane %v40, 1
    %v42 = vadd.f32 %v40, %v41
    %s43 = sld [smem:[#allocation2]]
    %v44 = vstv %s43
    %v45 = vadd.f32 %v42, %v44
    %vm46 = vcmask 57344
    %47 = vst.msk [vmem:[#allocation3] sm:$0x1] %vm46, %v45
    // Predicated region
    $region14: #{tpu_custom_call.1} parent=1 // pred_check
      _
    $region15: #{tpu_custom_call.1} parent=1 // pred_check_branch
      %49 = sbr.rel (0) target = $region17
    $region16: #{tpu_custom_call.1} parent=1 // pred_region
      %s51 = ssub.s32 16, 16
      %52 = vsyncadd [#allocation4], %s51
      %s54 = sshll.u32 [#allocation3], 4
      %s55 = int_to_ptr.vmem [resolvable:$true] %s54
      %57 = dma.vmem_to_hbm [thread:$0]  %s55, 16, %s3, [#allocation4]
    $region17: #{tpu_custom_call.1} parent=1 // pred_fallthru
      _
    // Predicated region
    $region18: #{tpu_custom_call.1} parent=1 // pred_check
      _
    $region19: #{tpu_custom_call.1} parent=1 // pred_check_branch
      %59 = sbr.rel (0) target = $region21
    $region20: #{tpu_custom_call.1} parent=1 // pred_region
      %60 = dma.done [#allocation4], 16
    $region21: #{tpu_custom_call.1} parent=1 // pred_fallthru
      _
    %61 = vsyncpa [#allocation4], 1

</llo_original>
